<compile_context>
chip_gen: v5e
topology: v5e:2x2
jax: 0.10.0
libtpu: 0.0.40
codegen_flags: <defaults>
</compile_context>

<pallas_src>
import functools

import jax
import jax.numpy as jnp
from jax.experimental import pallas as pl
from jax.experimental.pallas import tpu as pltpu

_LN_EPS = 1e-5  # PyTorch nn.LayerNorm default


def _layernorm(x, gamma, beta, eps):
    mu = jnp.mean(x, axis=-1, keepdims=True)
    var = jnp.mean(jnp.square(x - mu), axis=-1, keepdims=True)
    return (x - mu) * jax.lax.rsqrt(var + eps) * gamma + beta


def _vmem_capacity_bytes(default=64 * 1024 * 1024):
    """Physical VMEM of the local TPU generation (conservative fallback)."""
    try:
        return int(pltpu.get_tpu_info().vmem_capacity_bytes)
    except Exception:
        return default


# --------------------------------------------------------------------------
# Prologue: a = relu(x @ w + b), one grid step per batch element.
# --------------------------------------------------------------------------
def _proj_relu_kernel(x_ref, w_ref, b_ref, o_ref):
    x = x_ref[0].astype(jnp.float32)                      # [S, C]
    y = jnp.dot(x, w_ref[...], preferred_element_type=jnp.float32) + b_ref[...]
    o_ref[0] = jnp.maximum(y, 0.0).astype(o_ref.dtype)


def _proj_relu(x, w, b):
    B, S, C = x.shape
    H = w.shape[1]
    return pl.pallas_call(
        _proj_relu_kernel,
        out_shape=jax.ShapeDtypeStruct((B, S, H), jnp.float32),
        grid=(B,),
        in_specs=[
            pl.BlockSpec((1, S, C), lambda b: (b, 0, 0)),
            pl.BlockSpec((C, H), lambda b: (0, 0)),
            pl.BlockSpec((1, H), lambda b: (0, 0)),
        ],
        out_specs=pl.BlockSpec((1, S, H), lambda b: (b, 0, 0)),
        compiler_params=pltpu.CompilerParams(dimension_semantics=("parallel",)),
    )(x, w, b.reshape(1, H))


# --------------------------------------------------------------------------
# Main kernel: one [tn, tt, H] output block per grid step.
# --------------------------------------------------------------------------
def _hadamard_kernel(a1_ref, a2_ref, w3_ref, b3_ref, g1_ref, be1_ref,
                     g2_ref, be2_ref, out_ref, *, eps: float):
    tn = a1_ref.shape[1]
    H = a1_ref.shape[2]
    tt = out_ref.shape[2]

    a1 = a1_ref[0]                                        # [tn, H] f32

    if a2_ref.shape[1] > tt:
        # a2 is VMEM-resident for the whole batch element; slice our tt rows.
        j = pl.program_id(2)
        start = pl.multiple_of(j * tt, tt)
        a2 = a2_ref[0, pl.ds(start, tt), :]               # [tt, H]
    else:
        a2 = a2_ref[0]                                    # [tt, H]

    # Outer Hadamard product, then a single flatten to 2-D (free when
    # tt % 8 == 0 and H stays on the lane axis).  Everything downstream stays
    # in [tn*tt, H] layout — row-wise LN, clean 2-D MXU matmul, LN, ReLU.
    prod = a1[:, None, :] * a2[None, :, :]                # [tn, tt, H]
    x = prod.reshape(tn * tt, H)

    x = _layernorm(x, g1_ref[...], be1_ref[...], eps)     # self.norm
    y = jnp.dot(x, w3_ref[...], preferred_element_type=jnp.float32) + b3_ref[...]
    y = _layernorm(y, g2_ref[...], be2_ref[...], eps)     # self.norm1
    y = jnp.maximum(y, 0.0)

    out_ref[0] = y.reshape(tn, tt, H).astype(out_ref.dtype)


def _pick_tiles(N, T, H, block_budget_bytes):
    """Pick (tn, tt): full dims or multiples of 8, f32 block within budget."""
    bytes_per_row = 4 * max(H, 1)
    row_budget = max(128, block_budget_bytes // bytes_per_row)   # tn * tt rows
    tt_cap = max(8, min(512, row_budget // 8))
    tt = T if T <= tt_cap else (tt_cap // 8) * 8
    tn_cap = max(8, row_budget // max(tt, 1))
    tn = N if N <= tn_cap else (tn_cap // 8) * 8
    return tn, tt


def hadamard_product(x1, x2, params, *, eps: float = _LN_EPS,
                     out_dtype=jnp.float32):
    """Pallas implementation of HadamardProduct.forward.

    Args:
      x1: [B, N, C1] phrase features.
      x2: [B, T, C2] video features.
      params: dict with
        w1 [C1,H], b1 [H]   (fc_1.weight.T, fc_1.bias)
        w2 [C2,H], b2 [H]   (fc_2.weight.T, fc_2.bias)
        w3 [H, H],  b3 [H]  (fc_3.weight.T, fc_3.bias)
        g1, be1 [H]         (self.norm  weight / bias)
        g2, be2 [H]         (self.norm1 weight / bias)
      out_dtype: output dtype (use jnp.bfloat16 to halve HBM writeback).
    Returns:
      [B, N, T, H] in out_dtype.
    """
    B, N, _ = x1.shape
    B2, T, _ = x2.shape
    assert B == B2
    H = params["w3"].shape[0]

    f32 = jnp.float32
    # fc_1 / fc_2 + ReLU prologue (tiny vs. the [B,N,T,H] work below).
    a1 = _proj_relu(x1.astype(f32), params["w1"].astype(f32),
                    params["b1"].astype(f32))              # [B, N, H]
    a2 = _proj_relu(x2.astype(f32), params["w2"].astype(f32),
                    params["b2"].astype(f32))              # [B, T, H]

    vmem_cap = _vmem_capacity_bytes()
    block_budget = max(1 << 20, vmem_cap // 12)   # ~10.6 MiB v6e, ~5.3 MiB v7x
    vmem_limit = min(int(vmem_cap * 3 // 4), 96 * 1024 * 1024)
    tn, tt = _pick_tiles(N, T, H, block_budget)
    grid = (B, pl.cdiv(N, tn), pl.cdiv(T, tt))

    # Keep a2 resident per batch element when it is small and tt tiles T.
    t_resident = (tt < T) and (T % tt == 0) and (T * H * 4 <= 4 * 1024 * 1024)
    if t_resident:
        a2_spec = pl.BlockSpec((1, T, H), lambda b, i, j: (b, 0, 0))
    else:
        a2_spec = pl.BlockSpec((1, tt, H), lambda b, i, j: (b, j, 0))

    # 2-D per-feature vectors (TPU prefers >=2-D operands).
    b3 = params["b3"].reshape(1, H).astype(f32)
    g1 = params["g1"].reshape(1, H).astype(f32)
    be1 = params["be1"].reshape(1, H).astype(f32)
    g2 = params["g2"].reshape(1, H).astype(f32)
    be2 = params["be2"].reshape(1, H).astype(f32)
    w3 = params["w3"].astype(f32)

    const_2d = lambda b, i, j: (0, 0)   # weights/biases: same block every step

    kernel = functools.partial(_hadamard_kernel, eps=eps)

    out = pl.pallas_call(
        kernel,
        out_shape=jax.ShapeDtypeStruct((B, N, T, H), out_dtype),
        grid=grid,
        in_specs=[
            pl.BlockSpec((1, tn, H), lambda b, i, j: (b, i, 0)),   # a1
            a2_spec,                                               # a2
            pl.BlockSpec((H, H), const_2d),                        # w3
            pl.BlockSpec((1, H), const_2d),                        # b3
            pl.BlockSpec((1, H), const_2d),                        # g1
            pl.BlockSpec((1, H), const_2d),                        # be1
            pl.BlockSpec((1, H), const_2d),                        # g2
            pl.BlockSpec((1, H), const_2d),                        # be2
        ],
        out_specs=pl.BlockSpec((1, tn, tt, H), lambda b, i, j: (b, i, j, 0)),
        compiler_params=pltpu.CompilerParams(
            dimension_semantics=("parallel", "parallel", "parallel"),
            vmem_limit_bytes=vmem_limit,
        ),
    )(a1, a2, w3, b3, g1, be1, g2, be2)

    return out


def _reference(x1, x2, p, eps=_LN_EPS):
    """Pure-JAX reference mirroring the PyTorch forward (default precision)."""
    a1 = jax.nn.relu(x1 @ p["w1"] + p["b1"])               # [B,N,H]
    a2 = jax.nn.relu(x2 @ p["w2"] + p["b2"])               # [B,T,H]
    x = a1[:, :, None, :] * a2[:, None, :, :]              # [B,N,T,H]
    x = _layernorm(x, p["g1"], p["be1"], eps)
    y = x @ p["w3"] + p["b3"]
    y = _layernorm(y, p["g2"], p["be2"], eps)
    return jax.nn.relu(y)


if __name__ == "__main__":
    # Small shapes consistent with the module: phrase [B,N,C1], vid [B,T,C2].
    # H = 128 keeps the lane axis dense (unmasked stores, full MXU tiles).
    B, N, T = 2, 8, 16
    C1, C2, H = 24, 40, 128

    key = jax.random.PRNGKey(0)
    ks = jax.random.split(key, 8)

    x1 = jax.random.normal(ks[0], (B, N, C1), dtype=jnp.float32)
    x2 = jax.random.normal(ks[1], (B, T, C2), dtype=jnp.float32)

    params = dict(
        w1=jax.random.normal(ks[2], (C1, H), dtype=jnp.float32) * 0.2,
        b1=jax.random.normal(ks[3], (H,), dtype=jnp.float32) * 0.1,
        w2=jax.random.normal(ks[4], (C2, H), dtype=jnp.float32) * 0.2,
        b2=jax.random.normal(ks[5], (H,), dtype=jnp.float32) * 0.1,
        w3=jax.random.normal(ks[6], (H, H), dtype=jnp.float32) * 0.2,
        b3=jax.random.normal(ks[7], (H,), dtype=jnp.float32) * 0.1,
        g1=jnp.ones((H,), jnp.float32),
        be1=jnp.zeros((H,), jnp.float32),
        g2=jnp.ones((H,), jnp.float32),
        be2=jnp.zeros((H,), jnp.float32),
    )

    out = hadamard_product(x1, x2, params)
    out = jax.block_until_ready(out)

    ref = _reference(x1, x2, params)
    assert out.shape == (B, N, T, H), out.shape
    # Tolerance loosened vs. the HIGHEST-precision version: matmuls now use the
    # default (bf16-pass) MXU precision with f32 accumulation.
    err = float(jnp.max(jnp.abs(out - ref)))
    assert jnp.allclose(out, ref, atol=1e-2, rtol=1e-2), err

    print("KERNEL_OK")
</pallas_src>

<mosaic_0001>
module attributes {stable_mosaic.version = 11 : i64} {
  func.func @_proj_relu_kernel(%arg0: i32, %arg1: memref<1x8x24xf32, #tpu.memory_space<vmem>>, %arg2: memref<24x128xf32, #tpu.memory_space<vmem>>, %arg3: memref<1x128xf32, #tpu.memory_space<vmem>>, %arg4: memref<1x8x128xf32, #tpu.memory_space<vmem>>) attributes {dimension_semantics = [#tpu.dimension_semantics<parallel>], iteration_bounds = array<i64: 2>, scalar_prefetch = 0 : i64, scratch_operands = 0 : i64, tpu.core_type = #tpu.core_type<tc>, window_params = [{transform_indices = @transform_0, window_bounds = array<i64: 1, 8, 24>}, {pipeline_mode = #tpu.pipeline_mode<synchronous>, transform_indices = @transform_1, window_bounds = array<i64: 24, 128>}, {pipeline_mode = #tpu.pipeline_mode<synchronous>, transform_indices = @transform_2, window_bounds = array<i64: 1, 128>}, {transform_indices = @transform_3, window_bounds = array<i64: 1, 8, 128>}]} {
    %c0 = arith.constant 0 : index
    %c0_0 = arith.constant 0 : index
    %c0_1 = arith.constant 0 : index
    %0 = vector.load %arg1[%c0, %c0_0, %c0_1] : memref<1x8x24xf32, #tpu.memory_space<vmem>>, vector<1x8x24xf32>
    %1 = vector.shape_cast %0 : vector<1x8x24xf32> to vector<8x24xf32>
    %c0_2 = arith.constant 0 : index
    %c0_3 = arith.constant 0 : index
    %2 = vector.load %arg2[%c0_2, %c0_3] : memref<24x128xf32, #tpu.memory_space<vmem>>, vector<24x128xf32>
    %cst = arith.constant dense<0.000000e+00> : vector<8x128xf32>
    %3 = tpu.matmul %1, %2, %cst {dimension_numbers = #tpu.dot_dimension_numbers<[1], [0], [0], [1], [0, 0, 1, 1], [], []>} : vector<8x24xf32>, vector<24x128xf32>, vector<8x128xf32> -> vector<8x128xf32>
    %c0_4 = arith.constant 0 : index
    %c0_5 = arith.constant 0 : index
    %4 = vector.load %arg3[%c0_4, %c0_5] : memref<1x128xf32, #tpu.memory_space<vmem>>, vector<1x128xf32>
    %5 = vector.broadcast %4 : vector<1x128xf32> to vector<8x128xf32>
    %6 = arith.addf %3, %5 : vector<8x128xf32>
    %cst_6 = arith.constant 0.000000e+00 : f32
    %7 = vector.broadcast %cst_6 : f32 to vector<8x128xf32>
    %8 = arith.maximumf %6, %7 : vector<8x128xf32>
    %c0_7 = arith.constant 0 : index
    %c0_8 = arith.constant 0 : index
    %c0_9 = arith.constant 0 : index
    %9 = vector.load %arg4[%c0_7, %c0_8, %c0_9] : memref<1x8x128xf32, #tpu.memory_space<vmem>>, vector<1x8x128xf32>
    %10 = vector.shape_cast %9 : vector<1x8x128xf32> to vector<8x128xf32>
    %11 = vector.shape_cast %8 : vector<8x128xf32> to vector<1x8x128xf32>
    tpu.vector_store %arg4[%c0_7, %c0_8, %c0_9], %11 {strides = array<i32>} : memref<1x8x128xf32, #tpu.memory_space<vmem>>, vector<1x8x128xf32>,
    return
  }
  func.func @transform_0(%arg0: i32) -> (i32, i32, i32) {
    %c0_i32 = arith.constant 0 : i32
    %c0_i32_0 = arith.constant 0 : i32
    %c0_i32_1 = arith.constant 0 : i32
    return %arg0, %c0_i32, %c0_i32_0 : i32, i32, i32
  }
  func.func @transform_1(%arg0: i32) -> (i32, i32) {
    %c0_i32 = arith.constant 0 : i32
    %c0_i32_0 = arith.constant 0 : i32
    %c0_i32_1 = arith.constant 0 : i32
    return %c0_i32, %c0_i32_0 : i32, i32
  }
  func.func @transform_2(%arg0: i32) -> (i32, i32) {
    %c0_i32 = arith.constant 0 : i32
    %c0_i32_0 = arith.constant 0 : i32
    %c0_i32_1 = arith.constant 0 : i32
    return %c0_i32, %c0_i32_0 : i32, i32
  }
  func.func @transform_3(%arg0: i32) -> (i32, i32, i32) {
    %c0_i32 = arith.constant 0 : i32
    %c0_i32_0 = arith.constant 0 : i32
    %c0_i32_1 = arith.constant 0 : i32
    return %arg0, %c0_i32, %c0_i32_0 : i32, i32, i32
  }
}

</mosaic_0001>

<llo_original>
// kernel: tpu_custom_call.1
$region0: #{tpu_custom_call.1}
  #allocation0 [shape = 'u32[]', space=smem, size = 0x4, offset = 0x4, fixed_abs, tag = 'smem constant byte address 0x4 - core index']
  #allocation1 [shape = 'u32[72,128]{1,0:T(1,128)}', space=vmem, size = 0x9000, scoped, tag = 'internal scratch']
  %s0 = inlined_call_operand.hbm [shape: f32[2,8,24], index: 0, kind: input, shape index: {}]
  %s1 = inlined_call_operand.hbm [shape: f32[24,128], index: 1, kind: input, shape index: {}]
  %s2 = inlined_call_operand.vmem [shape: f32[1,128], index: 2, kind: input, shape index: {}]
  %s3 = inlined_call_operand.hbm [shape: f32[2,8,128], index: 3, kind: output, shape index: {}]
  %s4 = sld [smem:[#allocation0]]
  $region53: #{tpu_custom_call.1} parent=0
    _
  %s6 = ssub.s32 1, %s4
  %s7 = scalar_select 0, %s6, %s4
  $region1: #{tpu_custom_call.1} parent=0
    #allocation2 [shape = 'u8[8192]{0}', space=vmem, size = 0x2000, scoped, tag = 'input window, operand 0']
    #allocation3 [shape = 's32[2]{0}', space=sflag, size = 0x8, scoped, tag = 'scoped memory for tpu_custom_call.1']
    #allocation4 [shape = 's32[2]{0}', space=sflag, size = 0x8, scoped, tag = 'scoped memory for tpu_custom_call.1']
    #allocation5 [shape = 'u8[12288]{0}', space=vmem, size = 0x3000, scoped, tag = 'input window, operand 1, single buffered']
    #allocation6 [shape = 's32[1]{0}', space=sflag, size = 0x4, scoped, tag = 'scoped memory for tpu_custom_call.1']
    #allocation7 [shape = 'u8[8192]{0}', space=vmem, size = 0x2000, scoped, tag = 'output window, operand 0']
    %8 = vsyncpa [#allocation3], 0
    %s9 = scalar_lea.sflag [#allocation3], 1
    %10 = vsyncpa %s9, 0
    %11 = vsyncpa [#allocation6], 0
    %12 = vsyncpa [#allocation4], 0
    %s13 = scalar_lea.sflag [#allocation4], 1
    %14 = vsyncpa %s13, 0
    loop: start=0, step=1, limit=4
    $region2: #{tpu_custom_call.1} parent=1 // loop_pre_header
      _
    $region3: #{tpu_custom_call.1} parent=1 // loop_header
      %s16 = sphi 0, %s20
      %p17 = scmp.ge.s32.totalorder %s16, 4
      %s26 = sphi 0, %s28
      %s29 = sphi 0, %s26
      %s30 = sphi 0, %s29
      %s46 = sphi 0, %s30
      %s50 = sphi 0, %s50
      %s52 = sphi 0, %s50
      %s53 = sphi 0, %s52
      %s67 = sphi 0, %s53
      %s71 = sphi 0, %s71
      %s73 = sphi 0, %s71
      %s74 = sphi 0, %s73
      %s88 = sphi 0, %s74
      %s94 = sphi 0, %s96
      %s97 = sphi 0, %s94
      %s98 = sphi 0, %s97
      %s114 = sphi 0, %s98
    $region4: #{tpu_custom_call.1} parent=1 // loop_header_branch
      %19 = sbr.rel (%p17) target = $region8
    $region5: #{tpu_custom_call.1} parent=1 // loop_body
      %s21 = ssub.s32 %s16, 1
      %s22 = ssub.s32 %s16, 2
      %s23 = sadd.s32 %s16, 1
      %s24 = ssub.s32 %s16, %s23
      %p25 = scmp.eq.s32.totalorder %s24, 0
      %s27 = sadd.s32 %s26, 1
      %s28 = scalar_select %p25, %s26, %s27
      %p31 = pneg %p25
      %p32 = scmp.eq.s32.totalorder %s16, 1
      %p33 = por %p31, %p32
      %p34 = scmp.ne.s32.totalorder %s26, %s29
      %p35 = scmp.eq.s32.totalorder %s16, 0
      %p36 = por %p34, %p35
      %p37 = scmp.ne.s32.totalorder %s26, %s29
      %p38 = scmp.eq.s32.totalorder %s21, 1
      %p39 = por %p37, %p38
      %p40 = scmp.ne.s32.totalorder %s29, %s30
      %p41 = scmp.eq.s32.totalorder %s21, 0
      %p42 = por %p40, %p41
      %p43 = scmp.ne.s32.totalorder %s29, %s30
      %p44 = scmp.eq.s32.totalorder %s22, 1
      %p45 = por %p43, %p44
      %p47 = scmp.ne.s32.totalorder %s30, %s46
      %p48 = scmp.eq.s32.totalorder %s22, 0
      %p49 = por %p47, %p48
      %s51 = sadd.s32 %s50, 1
      %p54 = scmp.eq.s32.totalorder %s16, 1
      %p55 = scmp.ne.s32.totalorder %s50, %s52
      %p56 = scmp.eq.s32.totalorder %s16, 0
      %p57 = por %p55, %p56
      %p58 = scmp.ne.s32.totalorder %s50, %s52
      %p59 = scmp.eq.s32.totalorder %s21, 1
      %p60 = por %p58, %p59
      %p61 = scmp.ne.s32.totalorder %s52, %s53
      %p62 = scmp.eq.s32.totalorder %s21, 0
      %p63 = por %p61, %p62
      %p64 = scmp.ne.s32.totalorder %s52, %s53
      %p65 = scmp.eq.s32.totalorder %s22, 1
      %p66 = por %p64, %p65
      %p68 = scmp.ne.s32.totalorder %s53, %s67
      %p69 = scmp.eq.s32.totalorder %s22, 0
      %p70 = por %p68, %p69
      %s72 = sadd.s32 %s71, 1
      %p75 = scmp.eq.s32.totalorder %s16, 1
      %p76 = scmp.ne.s32.totalorder %s71, %s73
      %p77 = scmp.eq.s32.totalorder %s16, 0
      %p78 = por %p76, %p77
      %p79 = scmp.ne.s32.totalorder %s71, %s73
      %p80 = scmp.eq.s32.totalorder %s21, 1
      %p81 = por %p79, %p80
      %p82 = scmp.ne.s32.totalorder %s73, %s74
      %p83 = scmp.eq.s32.totalorder %s21, 0
      %p84 = por %p82, %p83
      %p85 = scmp.ne.s32.totalorder %s73, %s74
      %p86 = scmp.eq.s32.totalorder %s22, 1
      %p87 = por %p85, %p86
      %p89 = scmp.ne.s32.totalorder %s74, %s88
      %p90 = scmp.eq.s32.totalorder %s22, 0
      %p91 = por %p89, %p90
      %s92 = ssub.s32 %s16, %s23
      %p93 = scmp.eq.s32.totalorder %s92, 0
      %s95 = sadd.s32 %s94, 1
      %s96 = scalar_select %p93, %s94, %s95
      %p99 = pneg %p93
      %p100 = scmp.eq.s32.totalorder %s16, 1
      %p101 = por %p99, %p100
      %p102 = scmp.ne.s32.totalorder %s94, %s97
      %p103 = scmp.eq.s32.totalorder %s16, 0
      %p104 = por %p102, %p103
      %p105 = scmp.ne.s32.totalorder %s94, %s97
      %p106 = scmp.eq.s32.totalorder %s21, 1
      %p107 = por %p105, %p106
      %p108 = scmp.ne.s32.totalorder %s97, %s98
      %p109 = scmp.eq.s32.totalorder %s21, 0
      %p110 = por %p108, %p109
      %p111 = scmp.ne.s32.totalorder %s97, %s98
      %p112 = scmp.eq.s32.totalorder %s22, 1
      %p113 = por %p111, %p112
      %p115 = scmp.ne.s32.totalorder %s98, %s114
      %p116 = scmp.eq.s32.totalorder %s22, 0
      %p117 = por %p115, %p116
      %p118 = scmp.le.s32.totalorder 1, %s16
      %p119 = scmp.lt.s32.totalorder %s16, 3
      %p120 = pnand %p118, %p119
      %p121 = pneg %p120
      // Predicated region
      $region9: #{tpu_custom_call.1} parent=5 // pred_check
        _
      $region10: #{tpu_custom_call.1} parent=5 // pred_check_branch
        %123 = sbr.rel (%p120) target = $region12
      $region11: #{tpu_custom_call.1} parent=5 // pred_region
        %s124 = ssub.s32 %s16, 1
        // Predicated region
        $region13: #{tpu_custom_call.1} parent=11 // pred_check
          %p125 = pneg %p63
        $region14: #{tpu_custom_call.1} parent=11 // pred_check_branch
          %127 = sbr.rel (%p125) target = $region16
        $region15: #{tpu_custom_call.1} parent=11 // pred_region
          %129 = vsyncadd [#allocation6], 0
          %s130 = sshll.u32 %s1, 4
          %s131 = int_to_ptr.hbm [resolvable:$true] %s130
          %s132 = sshll.u32 [#allocation5], 4
          %s133 = int_to_ptr.vmem [resolvable:$true] %s132
          %138 = dma.hbm_to_vmem [thread:$0]  %s131, 384, %s133, [#allocation6], 128, 128, 8
        $region16: #{tpu_custom_call.1} parent=11 // pred_fallthru
          _
        // Predicated region
        $region17: #{tpu_custom_call.1} parent=11 // pred_check
          %p139 = pneg %p84
        $region18: #{tpu_custom_call.1} parent=11 // pred_check_branch
          %141 = sbr.rel (%p139) target = $region20
        $region19: #{tpu_custom_call.1} parent=11 // pred_region
          _
        $region20: #{tpu_custom_call.1} parent=11 // pred_fallthru
          _
      $region12: #{tpu_custom_call.1} parent=5 // pred_fallthru
        _
      %p142 = scmp.lt.s32.totalorder %s16, 2
      // Predicated region
      $region21: #{tpu_custom_call.1} parent=5 // pred_check
        %p143 = pneg %p142
      $region22: #{tpu_custom_call.1} parent=5 // pred_check_branch
        %145 = sbr.rel (%p143) target = $region24
      $region23: #{tpu_custom_call.1} parent=5 // pred_region
        // Predicated region
        $region25: #{tpu_custom_call.1} parent=23 // pred_check
          %p146 = pneg %p36
        $region26: #{tpu_custom_call.1} parent=23 // pred_check_branch
          %148 = sbr.rel (%p146) target = $region28
        $region27: #{tpu_custom_call.1} parent=23 // pred_region
          %s149 = sand.u32 %s26, 1
          %s150 = scalar_lea.sflag [#allocation3], %s149
          %s151 = sand.u32 %s26, 1
          %s152 = smul.addr %s151, 8
          %s153 = scalar_lea.vmem [#allocation2], %s152
          %155 = vsyncadd %s150, 0
          %s156 = smul.addr %s16, 8
          %s157 = scalar_lea.hbm %s0, %s156
          %s159 = sshll.u32 %s157, 4
          %s160 = int_to_ptr.hbm [resolvable:$true] %s159
          %s161 = sshll.u32 %s153, 4
          %s162 = int_to_ptr.vmem [resolvable:$true] %s161
          %164 = dma.hbm_to_vmem [thread:$0]  %s160, 128, %s162, %s150
        $region28: #{tpu_custom_call.1} parent=23 // pred_fallthru
          _
      $region24: #{tpu_custom_call.1} parent=5 // pred_fallthru
        _
      %p165 = scmp.le.s32.totalorder 1, %s16
      %p166 = scmp.lt.s32.totalorder %s16, 3
      %p167 = pnand %p165, %p166
      %p168 = pneg %p167
      // Predicated region
      $region29: #{tpu_custom_call.1} parent=5 // pred_check
        _
      $region30: #{tpu_custom_call.1} parent=5 // pred_check_branch
        %170 = sbr.rel (%p167) target = $region32
      $region31: #{tpu_custom_call.1} parent=5 // pred_region
        %s171 = ssub.s32 %s16, 1
        %s172 = sand.u32 %s29, 1
        %s173 = scalar_lea.sflag [#allocation3], %s172
        %s174 = sand.u32 %s29, 1
        %s175 = smul.addr %s174, 8
        %s176 = scalar_lea.vmem [#allocation2], %s175
        // Predicated region
        $region33: #{tpu_custom_call.1} parent=31 // pred_check
          %p177 = pneg %p42
        $region34: #{tpu_custom_call.1} parent=31 // pred_check_branch
          %179 = sbr.rel (%p177) target = $region36
        $region35: #{tpu_custom_call.1} parent=31 // pred_region
          %181 = dma.done %s173, 128
        $region36: #{tpu_custom_call.1} parent=31 // pred_fallthru
          _
        // Predicated region
        $region37: #{tpu_custom_call.1} parent=31 // pred_check
          %p182 = pneg %p63
        $region38: #{tpu_custom_call.1} parent=31 // pred_check_branch
          %184 = sbr.rel (%p182) target = $region40
        $region39: #{tpu_custom_call.1} parent=31 // pred_region
          %186 = dma.done [#allocation6], 384
        $region40: #{tpu_custom_call.1} parent=31 // pred_fallthru
          _
        %s187 = sand.u32 %s29, 1
        %s188 = scalar_lea.sflag [#allocation3], %s187
        %s189 = sand.u32 %s29, 1
        %s190 = smul.addr %s189, 8
        %s191 = scalar_lea.vmem [#allocation2], %s190
        %p192 = pneg %p42
        %p193 = pneg %p39
        %p194 = pneg %p63
        %p195 = pneg %p60
        %p196 = pneg %p84
        %p197 = pneg %p81
        %p198 = pneg %p110
        %p199 = pneg %p107
        %s200 = sand.u32 %s97, 1
        %s201 = scalar_lea.sflag [#allocation4], %s200
        %s202 = sand.u32 %s97, 1
        %s203 = smul.addr %s202, 8
        %s204 = scalar_lea.vmem [#allocation7], %s203
        %v205 = vld [vmem:[%s176] sm:$0xff]
        %v206 = vld [vmem:[#allocation5] sm:$0xff]
        %v207 = vld [vmem:[#allocation5 + $0x8] sm:$0xff]
        %v208 = vld [vmem:[#allocation5 + $0x10] sm:$0xff]
        %v209 = vld [vmem:[%s2] sm:$0x1]
        %v211 = vperm.slane %v209, 0
        %vm213 = vcmask 195584
        %v215 = vsel %vm213, %v205, 0
        %217 = vmatpush.msra.mxu0 0.0
        %218 = vmatpush.msra.mxu0 0.0
        %219 = vmatpush.msra.mxu0 0.0
        %220 = vmatpush.msra.mxu0 0.0
        %221 = vmatpush.msra.mxu0 0.0
        %222 = vmatpush.msra.mxu0 0.0
        %223 = vmatpush.msra.mxu0 0.0
        %224 = vmatpush.msra.mxu0 0.0
        %225 = vmatpush.msra.mxu0 0.0
        %226 = vmatpush.msra.mxu0 0.0
        %227 = vmatpush.msra.mxu0 0.0
        %228 = vmatpush.msra.mxu0 0.0
        %229 = vmatpush.msra.mxu0 0.0
        %230 = vmatpush.msra.mxu0 %v208
        %231 = vmatpush.msra.mxu0 %v207
        %232 = vmatpush.msra.mxu0 %v206
        %233 = vmatmul.f32.gmra.mxu0 %v215
        %v234 = vpop.f32.mrf.mxu0
        %v235 = vadd.f32 %v211, %v234
        %236 = vdwg.mxu0
        %v237 = vmax.f32 %v235, 0.0
        %238 = vst [vmem:[%s204] sm:$0xff] %v237
        %s239 = sand.u32 %s97, 1
        %s240 = scalar_lea.sflag [#allocation4], %s239
        %s241 = sand.u32 %s97, 1
        %s242 = smul.addr %s241, 8
        %s243 = scalar_lea.vmem [#allocation7], %s242
        // Predicated region
        $region41: #{tpu_custom_call.1} parent=31 // pred_check
          %p244 = pneg %p107
        $region42: #{tpu_custom_call.1} parent=31 // pred_check_branch
          %246 = sbr.rel (%p244) target = $region44
        $region43: #{tpu_custom_call.1} parent=31 // pred_region
          %248 = vsyncadd %s240, 0
          %s249 = smul.addr %s21, 8
          %s250 = scalar_lea.hbm %s3, %s249
          %s252 = sshll.u32 %s243, 4
          %s253 = int_to_ptr.vmem [resolvable:$true] %s252
          %s254 = sshll.u32 %s250, 4
          %s255 = int_to_ptr.hbm [resolvable:$true] %s254
          %257 = dma.vmem_to_hbm [thread:$0]  %s253, 128, %s255, %s240
        $region44: #{tpu_custom_call.1} parent=31 // pred_fallthru
          _
      $region32: #{tpu_custom_call.1} parent=5 // pred_fallthru
        _
      %p258 = scmp.le.s32.totalorder 2, %s16
      // Predicated region
      $region45: #{tpu_custom_call.1} parent=5 // pred_check
        %p259 = pneg %p258
      $region46: #{tpu_custom_call.1} parent=5 // pred_check_branch
        %261 = sbr.rel (%p259) target = $region48
      $region47: #{tpu_custom_call.1} parent=5 // pred_region
        %s262 = ssub.s32 %s16, 2
        // Predicated region
        $region49: #{tpu_custom_call.1} parent=47 // pred_check
          %p263 = pneg %p113
        $region50: #{tpu_custom_call.1} parent=47 // pred_check_branch
          %265 = sbr.rel (%p263) target = $region52
        $region51: #{tpu_custom_call.1} parent=47 // pred_region
          %s266 = sand.u32 %s98, 1
          %s267 = scalar_lea.sflag [#allocation4], %s266
          %s268 = sand.u32 %s98, 1
          %s269 = smul.addr %s268, 8
          %s270 = scalar_lea.vmem [#allocation7], %s269
          %272 = dma.done %s267, 128
        $region52: #{tpu_custom_call.1} parent=47 // pred_fallthru
          _
      $region48: #{tpu_custom_call.1} parent=5 // pred_fallthru
        _
    $region6: #{tpu_custom_call.1} parent=1 // loop_footer
      %s20 = sadd.s32 1, %s16
    $region7: #{tpu_custom_call.1} parent=1 // loop_footer_branch
      %15 = sbr.rel target = $region3
    $region8: #{tpu_custom_call.1} parent=1 // loop_exit
      _
    %273 = vsyncpa [#allocation3], 1
    %s274 = scalar_lea.sflag [#allocation3], 1
    %275 = vsyncpa %s274, 1
    %276 = vsyncpa [#allocation6], 1
    %277 = vsyncpa [#allocation4], 1
    %s278 = scalar_lea.sflag [#allocation4], 1
    %279 = vsyncpa %s278, 1

</llo_original>
